<compile_context>
chip_gen: v7x
topology: tpu7x:2x2x1
jax: 0.10.0
libtpu: 0.0.40
codegen_flags: <defaults>
</compile_context>

<pallas_src>
import functools

import jax
import jax.numpy as jnp
from jax.experimental import pallas as pl
from jax.experimental.pallas import tpu as pltpu

BN_EPS = 1e-5


def _mlp_kernel(x_ref,
                w01_ref, b01_ref,
                w2_ref, b2_ref,
                w3_ref, b3_ref,
                o_ref):
    """Fused (linear+h1+BN1)->ReLU -> (h2+BN2)->ReLU -> h3 -> sigmoid."""
    cdt = w01_ref.dtype  # compute dtype (x arrives pre-cast); biases are f32.

    # self.a1(self.bn1(self.h1(self.linear(x))))  -- BN folded, linears fused.
    h = jnp.dot(x_ref[...], w01_ref[...],
                preferred_element_type=jnp.float32) + b01_ref[...]
    h = jnp.maximum(h, 0.0)

    # self.a2(self.bn2(self.h2(.)))  -- BN folded into w2/b2.
    h = jnp.dot(h.astype(cdt), w2_ref[...],
                preferred_element_type=jnp.float32) + b2_ref[...]
    h = jnp.maximum(h, 0.0)

    # self.d2: Dropout(p=0.1) -> identity in eval mode.

    # self.a3(self.h3(.))  -- output dim is lane-padded to a multiple of 128.
    logits = jnp.dot(h.astype(cdt), w3_ref[...],
                     preferred_element_type=jnp.float32) + b3_ref[...]
    o_ref[...] = jax.nn.sigmoid(logits).astype(o_ref.dtype)


def prepare_params(params, compute_dtype=jnp.float32):
    """One-time parameter prep (hoisted out of the per-call forward).

    Folds BatchNorm running stats into the preceding Linears, fuses
    self.linear with the folded h1 (no nonlinearity between them), lane-pads
    the narrow output Linear to a multiple of 128, and casts the MXU-facing
    weights to `compute_dtype` (biases stay f32).
    """
    # Fold BN1 into h1, BN2 into h2 (eval-mode running stats).
    s1 = params["bn1_g"] * jax.lax.rsqrt(params["bn1_v"] + BN_EPS)
    w1 = params["w1"] * s1
    b1 = (params["b1"] - params["bn1_m"]) * s1 + params["bn1_b"]
    s2 = params["bn2_g"] * jax.lax.rsqrt(params["bn2_v"] + BN_EPS)
    w2 = params["w2"] * s2
    b2 = (params["b2"] - params["bn2_m"]) * s2 + params["bn2_b"]

    # Algebraic fusion: (x @ w0 + b0) @ w1 + b1 == x @ (w0 @ w1) + (b0 @ w1 + b1).
    w01 = params["w0"] @ w1
    b01 = params["b0"] @ w1 + b1

    # Lane-pad the narrow output dim to a full 128-lane multiple.
    n_out = params["w3"].shape[1]
    n_out_p = ((n_out + 127) // 128) * 128
    w3 = jnp.pad(params["w3"], ((0, 0), (0, n_out_p - n_out)))
    b3 = jnp.pad(params["b3"], ((0, 0), (0, n_out_p - n_out)))

    prepped = dict(
        w01=w01.astype(compute_dtype), b01=b01.astype(jnp.float32),
        w2=w2.astype(compute_dtype), b2=b2.astype(jnp.float32),
        w3=w3.astype(compute_dtype), b3=b3.astype(jnp.float32),
    )
    return prepped, n_out


@functools.partial(jax.jit, static_argnames=("n_out", "block_b"))
def model2_forward(x, prepped, *, n_out, block_b=512):
    """x: (B, n_inputs) f32. prepped: output of prepare_params()."""
    B, n_inputs = x.shape
    cdt = prepped["w01"].dtype
    n_hidden = prepped["w2"].shape[1]
    n_out_p = prepped["w3"].shape[1]

    # Cast the streamed activation once in the wrapper (no-op for f32).
    x = x.astype(cdt)

    # ---- Batch tile sizing ----
    # Multiple of 8 sublanes, capped at B; if the whole batch would fit in one
    # tile, split into two so the "parallel" grid axis engages both v7x
    # TensorCores and DMA pipelines with compute. On v5e/v6e pass a larger
    # block_b (1024-4096) at large B to amortize per-step overhead.
    block_b = max(8, min(block_b, B))
    block_b = ((block_b + 7) // 8) * 8
    if block_b * 2 > B and B > 8:
        block_b = max(8, (((B + 1) // 2 + 7) // 8) * 8)
    grid_b = pl.cdiv(B, block_b)

    # Arbitrary batch sizes: pad with zero rows, slice them off afterwards.
    B_pad = grid_b * block_b
    if B_pad != B:
        x = jnp.pad(x, ((0, B_pad - B), (0, 0)))

    row_spec = lambda shape: pl.BlockSpec(shape, lambda i: (i, 0))
    # Replicated parameters: block index (0,0) every step -> DMA'd once.
    rep_spec = lambda shape: pl.BlockSpec(shape, lambda i: (0, 0))

    in_specs = [
        row_spec((block_b, n_inputs)),                             # x
        rep_spec((n_inputs, n_hidden)), rep_spec((1, n_hidden)),   # fused linear+h1 (BN folded)
        rep_spec((n_hidden, n_hidden)), rep_spec((1, n_hidden)),   # h2 (BN folded)
        rep_spec((n_hidden, n_out_p)), rep_spec((1, n_out_p)),     # h3 (lane-padded)
    ]

    out_padded = pl.pallas_call(
        _mlp_kernel,
        out_shape=jax.ShapeDtypeStruct((B_pad, n_out_p), cdt),
        grid_spec=pltpu.PrefetchScalarGridSpec(
            num_scalar_prefetch=0,
            grid=(grid_b,),
            in_specs=in_specs,
            out_specs=row_spec((block_b, n_out_p)),
        ),
        compiler_params=pltpu.CompilerParams(
            dimension_semantics=("parallel",),
        ),
    )(x, prepped["w01"], prepped["b01"], prepped["w2"], prepped["b2"],
      prepped["w3"], prepped["b3"])

    # Drop batch padding and lane padding outside the kernel.
    return out_padded[:B, :n_out]


def init_params(key, n_inputs, d_model, n_hidden, n_out):
    """Deterministic synthetic init mimicking the PyTorch __init__ ranges.

    Weights stored transposed ((fan_in, fan_out)) for y = x @ W + b.
    BatchNorm running stats are made non-trivial to exercise the fold.
    """
    ks = jax.random.split(key, 16)

    def uniform(k, shape, bound):
        return jax.random.uniform(k, shape, jnp.float32, -bound, bound)

    # nn.Linear default: U(-1/sqrt(fan_in), 1/sqrt(fan_in))
    w0 = uniform(ks[0], (n_inputs, d_model), 1.0 / jnp.sqrt(n_inputs))
    b0 = uniform(ks[1], (1, d_model), 1.0 / jnp.sqrt(n_inputs))
    # h1 / h2: kaiming_uniform_(relu): bound = sqrt(6 / fan_in)
    w1 = uniform(ks[2], (d_model, n_hidden), jnp.sqrt(6.0 / d_model))
    b1 = uniform(ks[3], (1, n_hidden), 1.0 / jnp.sqrt(d_model))
    w2 = uniform(ks[4], (n_hidden, n_hidden), jnp.sqrt(6.0 / n_hidden))
    b2 = uniform(ks[5], (1, n_hidden), 1.0 / jnp.sqrt(n_hidden))
    # h3: xavier_uniform_: bound = sqrt(6 / (fan_in + fan_out))
    w3 = uniform(ks[6], (n_hidden, n_out), jnp.sqrt(6.0 / (n_hidden + n_out)))
    b3 = uniform(ks[7], (1, n_out), 1.0 / jnp.sqrt(n_hidden))

    # Non-trivial BatchNorm running stats / affine params.
    bn1_g = 1.0 + 0.1 * jax.random.normal(ks[8], (1, n_hidden), jnp.float32)
    bn1_b = 0.1 * jax.random.normal(ks[9], (1, n_hidden), jnp.float32)
    bn1_m = 0.05 * jax.random.normal(ks[10], (1, n_hidden), jnp.float32)
    bn1_v = jax.random.uniform(ks[11], (1, n_hidden), jnp.float32, 0.5, 2.0)
    bn2_g = 1.0 + 0.1 * jax.random.normal(ks[12], (1, n_hidden), jnp.float32)
    bn2_b = 0.1 * jax.random.normal(ks[13], (1, n_hidden), jnp.float32)
    bn2_m = 0.05 * jax.random.normal(ks[14], (1, n_hidden), jnp.float32)
    bn2_v = jax.random.uniform(ks[15], (1, n_hidden), jnp.float32, 0.5, 2.0)

    return dict(
        w0=w0, b0=b0,
        w1=w1, b1=b1, bn1_g=bn1_g, bn1_b=bn1_b, bn1_m=bn1_m, bn1_v=bn1_v,
        w2=w2, b2=b2, bn2_g=bn2_g, bn2_b=bn2_b, bn2_m=bn2_m, bn2_v=bn2_v,
        w3=w3, b3=b3,
    )


def _reference(x, p):
    """Pure-JAX reference of the same (eval-mode) forward, un-folded / un-fused."""
    out = x @ p["w0"] + p["b0"]
    h = out @ p["w1"] + p["b1"]
    h = (h - p["bn1_m"]) / jnp.sqrt(p["bn1_v"] + BN_EPS) * p["bn1_g"] + p["bn1_b"]
    h = jnp.maximum(h, 0.0)
    h = h @ p["w2"] + p["b2"]
    h = (h - p["bn2_m"]) / jnp.sqrt(p["bn2_v"] + BN_EPS) * p["bn2_g"] + p["bn2_b"]
    h = jnp.maximum(h, 0.0)
    return jax.nn.sigmoid(h @ p["w3"] + p["b3"])


if __name__ == "__main__":
    # Small shapes consistent with Model2(n_inputs, d_model, n_hidden, n_out).
    # B=300 deliberately NOT a multiple of the tile to exercise batch padding.
    B, n_inputs, d_model, n_hidden, n_out = 300, 32, 64, 128, 16

    key = jax.random.PRNGKey(0)
    kx, kp = jax.random.split(key)
    x = jax.random.normal(kx, (B, n_inputs), jnp.float32)
    params = init_params(kp, n_inputs, d_model, n_hidden, n_out)

    y_ref = _reference(x, params)

    # f32 path (checked against the un-folded / un-fused reference).
    prepped_f32, nout = prepare_params(params, compute_dtype=jnp.float32)
    y = model2_forward(x, prepped_f32, n_out=nout)                 # auto >=2-step grid
    jax.block_until_ready(y)
    assert y.shape == (B, n_out)
    assert jnp.allclose(y, y_ref, atol=1e-4, rtol=1e-4), "f32 mismatch vs reference"

    # A different explicit tiling (3 grid steps + partial-tile padding).
    y2 = model2_forward(x, prepped_f32, n_out=nout, block_b=128)
    jax.block_until_ready(y2)
    assert jnp.allclose(y2, y_ref, atol=1e-4, rtol=1e-4), "f32 (block_b=128) mismatch"

    # bf16 weight/activation path (looser tolerance; recommended on v6e/v7x).
    prepped_bf16, _ = prepare_params(params, compute_dtype=jnp.bfloat16)
    y_bf16 = model2_forward(x, prepped_bf16, n_out=nout)
    jax.block_until_ready(y_bf16)
    assert jnp.allclose(y_bf16.astype(jnp.float32), y_ref, atol=5e-2, rtol=0.0), \
        "bf16 mismatch vs reference"

    print("KERNEL_OK")
</pallas_src>

<mosaic_0001>
module attributes {stable_mosaic.version = 11 : i64} {
  func.func @_mlp_kernel(%arg0: i32, %arg1: memref<152x32xf32, #tpu.memory_space<vmem>>, %arg2: memref<32x128xf32, #tpu.memory_space<vmem>>, %arg3: memref<1x128xf32, #tpu.memory_space<vmem>>, %arg4: memref<128x128xf32, #tpu.memory_space<vmem>>, %arg5: memref<1x128xf32, #tpu.memory_space<vmem>>, %arg6: memref<128x128xf32, #tpu.memory_space<vmem>>, %arg7: memref<1x128xf32, #tpu.memory_space<vmem>>, %arg8: memref<152x128xf32, #tpu.memory_space<vmem>>) attributes {dimension_semantics = [#tpu.dimension_semantics<parallel>], iteration_bounds = array<i64: 2>, scalar_prefetch = 0 : i64, scratch_operands = 0 : i64, tpu.core_type = #tpu.core_type<tc>, window_params = [{transform_indices = @transform_0, window_bounds = array<i64: 152, 32>}, {pipeline_mode = #tpu.pipeline_mode<synchronous>, transform_indices = @transform_1, window_bounds = array<i64: 32, 128>}, {pipeline_mode = #tpu.pipeline_mode<synchronous>, transform_indices = @transform_2, window_bounds = array<i64: 1, 128>}, {pipeline_mode = #tpu.pipeline_mode<synchronous>, transform_indices = @transform_3, window_bounds = array<i64: 128, 128>}, {pipeline_mode = #tpu.pipeline_mode<synchronous>, transform_indices = @transform_4, window_bounds = array<i64: 1, 128>}, {pipeline_mode = #tpu.pipeline_mode<synchronous>, transform_indices = @transform_5, window_bounds = array<i64: 128, 128>}, {pipeline_mode = #tpu.pipeline_mode<synchronous>, transform_indices = @transform_6, window_bounds = array<i64: 1, 128>}, {transform_indices = @transform_7, window_bounds = array<i64: 152, 128>}]} {
    %c0 = arith.constant 0 : index
    %c0_0 = arith.constant 0 : index
    %0 = vector.load %arg1[%c0, %c0_0] : memref<152x32xf32, #tpu.memory_space<vmem>>, vector<152x32xf32>
    %c0_1 = arith.constant 0 : index
    %c0_2 = arith.constant 0 : index
    %1 = vector.load %arg2[%c0_1, %c0_2] : memref<32x128xf32, #tpu.memory_space<vmem>>, vector<32x128xf32>
    %cst = arith.constant dense<0.000000e+00> : vector<152x128xf32>
    %2 = tpu.matmul %0, %1, %cst {dimension_numbers = #tpu.dot_dimension_numbers<[1], [0], [0], [1], [0, 0, 1, 1], [], []>} : vector<152x32xf32>, vector<32x128xf32>, vector<152x128xf32> -> vector<152x128xf32>
    %c0_3 = arith.constant 0 : index
    %c0_4 = arith.constant 0 : index
    %3 = vector.load %arg3[%c0_3, %c0_4] : memref<1x128xf32, #tpu.memory_space<vmem>>, vector<1x128xf32>
    %4 = vector.broadcast %3 : vector<1x128xf32> to vector<152x128xf32>
    %5 = arith.addf %2, %4 : vector<152x128xf32>
    %cst_5 = arith.constant 0.000000e+00 : f32
    %6 = vector.broadcast %cst_5 : f32 to vector<152x128xf32>
    %7 = arith.maximumf %5, %6 : vector<152x128xf32>
    %c0_6 = arith.constant 0 : index
    %c0_7 = arith.constant 0 : index
    %8 = vector.load %arg4[%c0_6, %c0_7] : memref<128x128xf32, #tpu.memory_space<vmem>>, vector<128x128xf32>
    %cst_8 = arith.constant dense<0.000000e+00> : vector<152x128xf32>
    %9 = tpu.matmul %7, %8, %cst_8 {dimension_numbers = #tpu.dot_dimension_numbers<[1], [0], [0], [1], [0, 0, 1, 1], [], []>} : vector<152x128xf32>, vector<128x128xf32>, vector<152x128xf32> -> vector<152x128xf32>
    %c0_9 = arith.constant 0 : index
    %c0_10 = arith.constant 0 : index
    %10 = vector.load %arg5[%c0_9, %c0_10] : memref<1x128xf32, #tpu.memory_space<vmem>>, vector<1x128xf32>
    %11 = vector.broadcast %10 : vector<1x128xf32> to vector<152x128xf32>
    %12 = arith.addf %9, %11 : vector<152x128xf32>
    %cst_11 = arith.constant 0.000000e+00 : f32
    %13 = vector.broadcast %cst_11 : f32 to vector<152x128xf32>
    %14 = arith.maximumf %12, %13 : vector<152x128xf32>
    %c0_12 = arith.constant 0 : index
    %c0_13 = arith.constant 0 : index
    %15 = vector.load %arg6[%c0_12, %c0_13] : memref<128x128xf32, #tpu.memory_space<vmem>>, vector<128x128xf32>
    %cst_14 = arith.constant dense<0.000000e+00> : vector<152x128xf32>
    %16 = tpu.matmul %14, %15, %cst_14 {dimension_numbers = #tpu.dot_dimension_numbers<[1], [0], [0], [1], [0, 0, 1, 1], [], []>} : vector<152x128xf32>, vector<128x128xf32>, vector<152x128xf32> -> vector<152x128xf32>
    %c0_15 = arith.constant 0 : index
    %c0_16 = arith.constant 0 : index
    %17 = vector.load %arg7[%c0_15, %c0_16] : memref<1x128xf32, #tpu.memory_space<vmem>>, vector<1x128xf32>
    %18 = vector.broadcast %17 : vector<1x128xf32> to vector<152x128xf32>
    %19 = arith.addf %16, %18 : vector<152x128xf32>
    %20 = arith.negf %19 : vector<152x128xf32>
    %21 = math.exp %20 : vector<152x128xf32>
    %cst_17 = arith.constant 1.000000e+00 : f32
    %22 = vector.broadcast %cst_17 : f32 to vector<152x128xf32>
    %23 = arith.addf %22, %21 : vector<152x128xf32>
    %24 = arith.divf %22, %23 : vector<152x128xf32>
    %c0_18 = arith.constant 0 : index
    %c0_19 = arith.constant 0 : index
    %25 = vector.load %arg8[%c0_18, %c0_19] : memref<152x128xf32, #tpu.memory_space<vmem>>, vector<152x128xf32>
    tpu.vector_store %arg8[%c0_18, %c0_19], %24 {strides = array<i32>} : memref<152x128xf32, #tpu.memory_space<vmem>>, vector<152x128xf32>,
    return
  }
  func.func @transform_0(%arg0: i32) -> (i32, i32) {
    %c0_i32 = arith.constant 0 : i32
    %c0_i32_0 = arith.constant 0 : i32
    return %arg0, %c0_i32 : i32, i32
  }
  func.func @transform_1(%arg0: i32) -> (i32, i32) {
    %c0_i32 = arith.constant 0 : i32
    %c0_i32_0 = arith.constant 0 : i32
    %c0_i32_1 = arith.constant 0 : i32
    return %c0_i32, %c0_i32_0 : i32, i32
  }
  func.func @transform_2(%arg0: i32) -> (i32, i32) {
    %c0_i32 = arith.constant 0 : i32
    %c0_i32_0 = arith.constant 0 : i32
    %c0_i32_1 = arith.constant 0 : i32
    return %c0_i32, %c0_i32_0 : i32, i32
  }
  func.func @transform_3(%arg0: i32) -> (i32, i32) {
    %c0_i32 = arith.constant 0 : i32
    %c0_i32_0 = arith.constant 0 : i32
    %c0_i32_1 = arith.constant 0 : i32
    return %c0_i32, %c0_i32_0 : i32, i32
  }
  func.func @transform_4(%arg0: i32) -> (i32, i32) {
    %c0_i32 = arith.constant 0 : i32
    %c0_i32_0 = arith.constant 0 : i32
    %c0_i32_1 = arith.constant 0 : i32
    return %c0_i32, %c0_i32_0 : i32, i32
  }
  func.func @transform_5(%arg0: i32) -> (i32, i32) {
    %c0_i32 = arith.constant 0 : i32
    %c0_i32_0 = arith.constant 0 : i32
    %c0_i32_1 = arith.constant 0 : i32
    return %c0_i32, %c0_i32_0 : i32, i32
  }
  func.func @transform_6(%arg0: i32) -> (i32, i32) {
    %c0_i32 = arith.constant 0 : i32
    %c0_i32_0 = arith.constant 0 : i32
    %c0_i32_1 = arith.constant 0 : i32
    return %c0_i32, %c0_i32_0 : i32, i32
  }
  func.func @transform_7(%arg0: i32) -> (i32, i32) {
    %c0_i32 = arith.constant 0 : i32
    %c0_i32_0 = arith.constant 0 : i32
    return %arg0, %c0_i32 : i32, i32
  }
}

</mosaic_0001>

<llo_original>
// kernel: model2_forward.1
$region0: #{model2_forward.1}
  #allocation0 [shape = 'u32[]', space=smem, size = 0x4, offset = 0x4, fixed_abs, tag = 'smem constant byte address 0x4 - core index']
  #allocation1 [shape = 'u32[144,128]{1,0:T(1,128)}', space=vmem, size = 0x12000, scoped, tag = 'internal scratch']
  %s0 = inlined_call_operand.vmem [shape: f32[304,32], index: 0, kind: input, shape index: {}]
  %s1 = inlined_call_operand.vmem [shape: f32[32,128], index: 1, kind: input, shape index: {}]
  %s2 = inlined_call_operand.vmem [shape: f32[1,128], index: 2, kind: input, shape index: {}]
  %s3 = inlined_call_operand.vmem [shape: f32[128,128], index: 3, kind: input, shape index: {}]
  %s4 = inlined_call_operand.vmem [shape: f32[1,128], index: 4, kind: input, shape index: {}]
  %s5 = inlined_call_operand.vmem [shape: f32[128,128], index: 5, kind: input, shape index: {}]
  %s6 = inlined_call_operand.vmem [shape: f32[1,128], index: 6, kind: input, shape index: {}]
  %s7 = inlined_call_operand.vmem [shape: f32[304,128], index: 7, kind: output, shape index: {}]
  %s8 = sld [smem:[#allocation0]]
  $region61: #{model2_forward.1} parent=0
    _
  %s10 = ssub.s32 1, %s8
  %s11 = scalar_select 0, %s10, %s8
  loop: start=0, step=1, limit=4
  $region2: #{model2_forward.1} parent=0 // loop_pre_header
    _
  $region3: #{model2_forward.1} parent=0 // loop_header
    %s13 = sphi 0, %s17
    %p14 = scmp.ge.s32.totalorder %s13, 4
    %s23 = sphi 0, %s25
    %s26 = sphi 0, %s23
    %s27 = sphi 0, %s26
    %s43 = sphi 0, %s27
    %s47 = sphi 0, %s47
    %s49 = sphi 0, %s47
    %s50 = sphi 0, %s49
    %s64 = sphi 0, %s50
    %s68 = sphi 0, %s68
    %s70 = sphi 0, %s68
    %s71 = sphi 0, %s70
    %s85 = sphi 0, %s71
    %s89 = sphi 0, %s89
    %s91 = sphi 0, %s89
    %s92 = sphi 0, %s91
    %s106 = sphi 0, %s92
    %s110 = sphi 0, %s110
    %s112 = sphi 0, %s110
    %s113 = sphi 0, %s112
    %s127 = sphi 0, %s113
    %s131 = sphi 0, %s131
    %s133 = sphi 0, %s131
    %s134 = sphi 0, %s133
    %s148 = sphi 0, %s134
    %s152 = sphi 0, %s152
    %s154 = sphi 0, %s152
    %s155 = sphi 0, %s154
    %s169 = sphi 0, %s155
    %s175 = sphi 0, %s177
    %s178 = sphi 0, %s175
    %s179 = sphi 0, %s178
    %s195 = sphi 0, %s179
  $region4: #{model2_forward.1} parent=0 // loop_header_branch
    %16 = sbr.rel (%p14) target = $region8
  $region5: #{model2_forward.1} parent=0 // loop_body
    %s18 = ssub.s32 %s13, 1
    %s19 = ssub.s32 %s13, 2
    %s20 = sadd.s32 %s13, 1
    %s21 = ssub.s32 %s13, %s20
    %p22 = scmp.eq.s32.totalorder %s21, 0
    %s24 = sadd.s32 %s23, 1
    %s25 = scalar_select %p22, %s23, %s24
    %p28 = pneg %p22
    %p29 = scmp.eq.s32.totalorder %s13, 1
    %p30 = por %p28, %p29
    %p31 = scmp.ne.s32.totalorder %s23, %s26
    %p32 = scmp.eq.s32.totalorder %s13, 0
    %p33 = por %p31, %p32
    %p34 = scmp.ne.s32.totalorder %s23, %s26
    %p35 = scmp.eq.s32.totalorder %s18, 1
    %p36 = por %p34, %p35
    %p37 = scmp.ne.s32.totalorder %s26, %s27
    %p38 = scmp.eq.s32.totalorder %s18, 0
    %p39 = por %p37, %p38
    %p40 = scmp.ne.s32.totalorder %s26, %s27
    %p41 = scmp.eq.s32.totalorder %s19, 1
    %p42 = por %p40, %p41
    %p44 = scmp.ne.s32.totalorder %s27, %s43
    %p45 = scmp.eq.s32.totalorder %s19, 0
    %p46 = por %p44, %p45
    %s48 = sadd.s32 %s47, 1
    %p51 = scmp.eq.s32.totalorder %s13, 1
    %p52 = scmp.ne.s32.totalorder %s47, %s49
    %p53 = scmp.eq.s32.totalorder %s13, 0
    %p54 = por %p52, %p53
    %p55 = scmp.ne.s32.totalorder %s47, %s49
    %p56 = scmp.eq.s32.totalorder %s18, 1
    %p57 = por %p55, %p56
    %p58 = scmp.ne.s32.totalorder %s49, %s50
    %p59 = scmp.eq.s32.totalorder %s18, 0
    %p60 = por %p58, %p59
    %p61 = scmp.ne.s32.totalorder %s49, %s50
    %p62 = scmp.eq.s32.totalorder %s19, 1
    %p63 = por %p61, %p62
    %p65 = scmp.ne.s32.totalorder %s50, %s64
    %p66 = scmp.eq.s32.totalorder %s19, 0
    %p67 = por %p65, %p66
    %s69 = sadd.s32 %s68, 1
    %p72 = scmp.eq.s32.totalorder %s13, 1
    %p73 = scmp.ne.s32.totalorder %s68, %s70
    %p74 = scmp.eq.s32.totalorder %s13, 0
    %p75 = por %p73, %p74
    %p76 = scmp.ne.s32.totalorder %s68, %s70
    %p77 = scmp.eq.s32.totalorder %s18, 1
    %p78 = por %p76, %p77
    %p79 = scmp.ne.s32.totalorder %s70, %s71
    %p80 = scmp.eq.s32.totalorder %s18, 0
    %p81 = por %p79, %p80
    %p82 = scmp.ne.s32.totalorder %s70, %s71
    %p83 = scmp.eq.s32.totalorder %s19, 1
    %p84 = por %p82, %p83
    %p86 = scmp.ne.s32.totalorder %s71, %s85
    %p87 = scmp.eq.s32.totalorder %s19, 0
    %p88 = por %p86, %p87
    %s90 = sadd.s32 %s89, 1
    %p93 = scmp.eq.s32.totalorder %s13, 1
    %p94 = scmp.ne.s32.totalorder %s89, %s91
    %p95 = scmp.eq.s32.totalorder %s13, 0
    %p96 = por %p94, %p95
    %p97 = scmp.ne.s32.totalorder %s89, %s91
    %p98 = scmp.eq.s32.totalorder %s18, 1
    %p99 = por %p97, %p98
    %p100 = scmp.ne.s32.totalorder %s91, %s92
    %p101 = scmp.eq.s32.totalorder %s18, 0
    %p102 = por %p100, %p101
    %p103 = scmp.ne.s32.totalorder %s91, %s92
    %p104 = scmp.eq.s32.totalorder %s19, 1
    %p105 = por %p103, %p104
    %p107 = scmp.ne.s32.totalorder %s92, %s106
    %p108 = scmp.eq.s32.totalorder %s19, 0
    %p109 = por %p107, %p108
    %s111 = sadd.s32 %s110, 1
    %p114 = scmp.eq.s32.totalorder %s13, 1
    %p115 = scmp.ne.s32.totalorder %s110, %s112
    %p116 = scmp.eq.s32.totalorder %s13, 0
    %p117 = por %p115, %p116
    %p118 = scmp.ne.s32.totalorder %s110, %s112
    %p119 = scmp.eq.s32.totalorder %s18, 1
    %p120 = por %p118, %p119
    %p121 = scmp.ne.s32.totalorder %s112, %s113
    %p122 = scmp.eq.s32.totalorder %s18, 0
    %p123 = por %p121, %p122
    %p124 = scmp.ne.s32.totalorder %s112, %s113
    %p125 = scmp.eq.s32.totalorder %s19, 1
    %p126 = por %p124, %p125
    %p128 = scmp.ne.s32.totalorder %s113, %s127
    %p129 = scmp.eq.s32.totalorder %s19, 0
    %p130 = por %p128, %p129
    %s132 = sadd.s32 %s131, 1
    %p135 = scmp.eq.s32.totalorder %s13, 1
    %p136 = scmp.ne.s32.totalorder %s131, %s133
    %p137 = scmp.eq.s32.totalorder %s13, 0
    %p138 = por %p136, %p137
    %p139 = scmp.ne.s32.totalorder %s131, %s133
    %p140 = scmp.eq.s32.totalorder %s18, 1
    %p141 = por %p139, %p140
    %p142 = scmp.ne.s32.totalorder %s133, %s134
    %p143 = scmp.eq.s32.totalorder %s18, 0
    %p144 = por %p142, %p143
    %p145 = scmp.ne.s32.totalorder %s133, %s134
    %p146 = scmp.eq.s32.totalorder %s19, 1
    %p147 = por %p145, %p146
    %p149 = scmp.ne.s32.totalorder %s134, %s148
    %p150 = scmp.eq.s32.totalorder %s19, 0
    %p151 = por %p149, %p150
    %s153 = sadd.s32 %s152, 1
    %p156 = scmp.eq.s32.totalorder %s13, 1
    %p157 = scmp.ne.s32.totalorder %s152, %s154
    %p158 = scmp.eq.s32.totalorder %s13, 0
    %p159 = por %p157, %p158
    %p160 = scmp.ne.s32.totalorder %s152, %s154
    %p161 = scmp.eq.s32.totalorder %s18, 1
    %p162 = por %p160, %p161
    %p163 = scmp.ne.s32.totalorder %s154, %s155
    %p164 = scmp.eq.s32.totalorder %s18, 0
    %p165 = por %p163, %p164
    %p166 = scmp.ne.s32.totalorder %s154, %s155
    %p167 = scmp.eq.s32.totalorder %s19, 1
    %p168 = por %p166, %p167
    %p170 = scmp.ne.s32.totalorder %s155, %s169
    %p171 = scmp.eq.s32.totalorder %s19, 0
    %p172 = por %p170, %p171
    %s173 = ssub.s32 %s13, %s20
    %p174 = scmp.eq.s32.totalorder %s173, 0
    %s176 = sadd.s32 %s175, 1
    %s177 = scalar_select %p174, %s175, %s176
    %p180 = pneg %p174
    %p181 = scmp.eq.s32.totalorder %s13, 1
    %p182 = por %p180, %p181
    %p183 = scmp.ne.s32.totalorder %s175, %s178
    %p184 = scmp.eq.s32.totalorder %s13, 0
    %p185 = por %p183, %p184
    %p186 = scmp.ne.s32.totalorder %s175, %s178
    %p187 = scmp.eq.s32.totalorder %s18, 1
    %p188 = por %p186, %p187
    %p189 = scmp.ne.s32.totalorder %s178, %s179
    %p190 = scmp.eq.s32.totalorder %s18, 0
    %p191 = por %p189, %p190
    %p192 = scmp.ne.s32.totalorder %s178, %s179
    %p193 = scmp.eq.s32.totalorder %s19, 1
    %p194 = por %p192, %p193
    %p196 = scmp.ne.s32.totalorder %s179, %s195
    %p197 = scmp.eq.s32.totalorder %s19, 0
    %p198 = por %p196, %p197
    %p199 = scmp.le.s32.totalorder 1, %s13
    %p200 = scmp.lt.s32.totalorder %s13, 3
    %p201 = pnand %p199, %p200
    %p202 = pneg %p201
    // Predicated region
    $region9: #{model2_forward.1} parent=5 // pred_check
      _
    $region10: #{model2_forward.1} parent=5 // pred_check_branch
      %204 = sbr.rel (%p201) target = $region12
    $region11: #{model2_forward.1} parent=5 // pred_region
      %s205 = ssub.s32 %s13, 1
      // Predicated region
      $region13: #{model2_forward.1} parent=11 // pred_check
        %p206 = pneg %p60
      $region14: #{model2_forward.1} parent=11 // pred_check_branch
        %208 = sbr.rel (%p206) target = $region16
      $region15: #{model2_forward.1} parent=11 // pred_region
        _
      $region16: #{model2_forward.1} parent=11 // pred_fallthru
        _
      // Predicated region
      $region17: #{model2_forward.1} parent=11 // pred_check
        %p209 = pneg %p81
      $region18: #{model2_forward.1} parent=11 // pred_check_branch
        %211 = sbr.rel (%p209) target = $region20
      $region19: #{model2_forward.1} parent=11 // pred_region
        _
      $region20: #{model2_forward.1} parent=11 // pred_fallthru
        _
      // Predicated region
      $region21: #{model2_forward.1} parent=11 // pred_check
        %p212 = pneg %p102
      $region22: #{model2_forward.1} parent=11 // pred_check_branch
        %214 = sbr.rel (%p212) target = $region24
      $region23: #{model2_forward.1} parent=11 // pred_region
        _
      $region24: #{model2_forward.1} parent=11 // pred_fallthru
        _
      // Predicated region
      $region25: #{model2_forward.1} parent=11 // pred_check
        %p215 = pneg %p123
      $region26: #{model2_forward.1} parent=11 // pred_check_branch
        %217 = sbr.rel (%p215) target = $region28
      $region27: #{model2_forward.1} parent=11 // pred_region
        _
      $region28: #{model2_forward.1} parent=11 // pred_fallthru
        _
      // Predicated region
      $region29: #{model2_forward.1} parent=11 // pred_check
        %p218 = pneg %p144
      $region30: #{model2_forward.1} parent=11 // pred_check_branch
        %220 = sbr.rel (%p218) target = $region32
      $region31: #{model2_forward.1} parent=11 // pred_region
        _
      $region32: #{model2_forward.1} parent=11 // pred_fallthru
        _
      // Predicated region
      $region33: #{model2_forward.1} parent=11 // pred_check
        %p221 = pneg %p165
      $region34: #{model2_forward.1} parent=11 // pred_check_branch
        %223 = sbr.rel (%p221) target = $region36
      $region35: #{model2_forward.1} parent=11 // pred_region
        _
      $region36: #{model2_forward.1} parent=11 // pred_fallthru
        _
    $region12: #{model2_forward.1} parent=5 // pred_fallthru
      _
    %p224 = scmp.lt.s32.totalorder %s13, 2
    // Predicated region
    $region37: #{model2_forward.1} parent=5 // pred_check
      %p225 = pneg %p224
    $region38: #{model2_forward.1} parent=5 // pred_check_branch
      %227 = sbr.rel (%p225) target = $region40
    $region39: #{model2_forward.1} parent=5 // pred_region
      // Predicated region
      $region41: #{model2_forward.1} parent=39 // pred_check
        %p228 = pneg %p33
      $region42: #{model2_forward.1} parent=39 // pred_check_branch
        %230 = sbr.rel (%p228) target = $region44
      $region43: #{model2_forward.1} parent=39 // pred_region
        %s231 = smul.u32 19, %s13
        %p232 = scmp.lt.s32.totalorder %s231, 37
        %s233 = scalar_select %p232, %s231, 37
        %s234 = smul.addr %s233, 8
        %s235 = scalar_lea.vmem %s0, %s234
        %s236 = smul.u32 19, %s13
      $region44: #{model2_forward.1} parent=39 // pred_fallthru
        _
    $region40: #{model2_forward.1} parent=5 // pred_fallthru
      _
    %p237 = scmp.le.s32.totalorder 1, %s13
    %p238 = scmp.lt.s32.totalorder %s13, 3
    %p239 = pnand %p237, %p238
    %p240 = pneg %p239
    // Predicated region
    $region45: #{model2_forward.1} parent=5 // pred_check
      _
    $region46: #{model2_forward.1} parent=5 // pred_check_branch
      %242 = sbr.rel (%p239) target = $region48
    $region47: #{model2_forward.1} parent=5 // pred_region
      %s243 = ssub.s32 %s13, 1
      %s244 = smul.u32 19, %s18
      %p245 = scmp.lt.s32.totalorder %s244, 37
      %s246 = scalar_select %p245, %s244, 37
      %s247 = smul.addr %s246, 8
      %s248 = scalar_lea.vmem %s0, %s247
      %p249 = pneg %p39
      %p250 = pneg %p36
      %p251 = pneg %p60
      %p252 = pneg %p57
      %p253 = pneg %p81
      %p254 = pneg %p78
      %p255 = pneg %p102
      %p256 = pneg %p99
      %p257 = pneg %p123
      %p258 = pneg %p120
      %p259 = pneg %p144
      %p260 = pneg %p141
      %p261 = pneg %p165
      %p262 = pneg %p162
      %p263 = pneg %p191
      %p264 = pneg %p188
      %s265 = smul.u32 19, %s18
      %p266 = scmp.lt.s32.totalorder %s265, 37
      %s267 = scalar_select %p266, %s265, 37
      %s268 = smul.addr %s267, 8
      %s269 = scalar_lea.vmem %s7, %s268
      %s270 = smul.u32 19, %s18
      %p271 = scmp.lt.s32.totalorder %s270, 37
      %s272 = scalar_select %p271, %s270, 37
      %s273 = smul.addr %s272, 8
      %s274 = scalar_lea.vmem %s0, %s273
      %s275 = smul.u32 19, %s18
      %s276 = smul.u32 19, %s18
      %p277 = scmp.lt.s32.totalorder %s276, 37
      %s278 = scalar_select %p277, %s276, 37
      %s279 = smul.addr %s278, 8
      %s280 = scalar_lea.vmem %s7, %s279
      %s281 = smul.u32 19, %s18
      %v282 = vld [vmem:[%s274] sm:$0xff]
      %v283 = vld [vmem:[%s274 + $0x8] sm:$0xff]
      %v284 = vld [vmem:[%s274 + $0x10] sm:$0xff]
      %v285 = vld [vmem:[%s274 + $0x18] sm:$0xff]
      %v286 = vld [vmem:[%s274 + $0x20] sm:$0xff]
      %v287 = vld [vmem:[%s274 + $0x28] sm:$0xff]
      %v288 = vld [vmem:[%s274 + $0x30] sm:$0xff]
      %v289 = vld [vmem:[%s274 + $0x38] sm:$0xff]
      %v290 = vld [vmem:[%s274 + $0x40] sm:$0xff]
      %v291 = vld [vmem:[%s274 + $0x48] sm:$0xff]
      %v292 = vld [vmem:[%s274 + $0x50] sm:$0xff]
      %v293 = vld [vmem:[%s274 + $0x58] sm:$0xff]
      %v294 = vld [vmem:[%s274 + $0x60] sm:$0xff]
      %v295 = vld [vmem:[%s274 + $0x68] sm:$0xff]
      %v296 = vld [vmem:[%s274 + $0x70] sm:$0xff]
      %v297 = vld [vmem:[%s274 + $0x78] sm:$0xff]
      %v298 = vld [vmem:[%s274 + $0x80] sm:$0xff]
      %v299 = vld [vmem:[%s274 + $0x88] sm:$0xff]
      %v300 = vld [vmem:[%s274 + $0x90] sm:$0xff]
      %v301 = vld [vmem:[%s1] sm:$0xff]
      %v302 = vld [vmem:[%s1 + $0x8] sm:$0xff]
      %v303 = vld [vmem:[%s1 + $0x10] sm:$0xff]
      %v304 = vld [vmem:[%s1 + $0x18] sm:$0xff]
      %v305 = vld [vmem:[%s2] sm:$0x1]
      %v307 = vlaneseq
      %v308 = vshrl.u32 %v307, 7
      %v309 = vsub.s32 0, %v308
      %v310 = vrot.slane %v305, %v309
      %vm312 = vcmask 261120
      %v314 = vsel %vm312, %v282, 0
      %v317 = vsel %vm312, %v283, 0
      %v320 = vsel %vm312, %v284, 0
      %v323 = vsel %vm312, %v285, 0
      %v326 = vsel %vm312, %v286, 0
      %v329 = vsel %vm312, %v287, 0
      %v332 = vsel %vm312, %v288, 0
      %v335 = vsel %vm312, %v289, 0
      %v338 = vsel %vm312, %v290, 0
      %v341 = vsel %vm312, %v291, 0
      %v344 = vsel %vm312, %v292, 0
      %v347 = vsel %vm312, %v293, 0
      %v350 = vsel %vm312, %v294, 0
      %v353 = vsel %vm312, %v295, 0
      %v356 = vsel %vm312, %v296, 0
      %v359 = vsel %vm312, %v297, 0
      %v362 = vsel %vm312, %v298, 0
      %v365 = vsel %vm312, %v299, 0
      %v368 = vsel %vm312, %v300, 0
      %370 = vmatprep.subr.mxu0 0.0
      %371 = vmatpush1.msra.mxu0 %v301
      %372 = vmatprep.subr.mxu0 0.0
      %373 = vmatpush1.msra.mxu0 %v302
      %374 = vmatprep.subr.mxu0 0.0
      %375 = vmatpush1.msra.mxu0 %v303
      %376 = vmatprep.subr.mxu0 0.0
      %377 = vmatpush1.msra.mxu0 %v304
      %378 = vmatprep.subr.mxu0 0.0
      %379 = vmatpush1.msra.mxu0 0.0
      %380 = vmatprep.subr.mxu0 0.0
      %381 = vmatpush1.msra.mxu0 0.0
      %382 = vmatprep.subr.mxu0 0.0
      %383 = vmatpush1.msra.mxu0 0.0
      %384 = vmatprep.subr.mxu0 0.0
      %385 = vmatpush1.msra.mxu0 0.0
      %386 = vmatprep.subr.mxu0 0.0
      %387 = vmatpush1.msra.mxu0 0.0
      %388 = vmatprep.subr.mxu0 0.0
      %389 = vmatpush1.msra.mxu0 0.0
      %390 = vmatprep.subr.mxu0 0.0
      %391 = vmatpush1.msra.mxu0 0.0
      %392 = vmatprep.subr.mxu0 0.0
      %393 = vmatpush1.msra.mxu0 0.0
      %394 = vmatprep.subr.mxu0 0.0
      %395 = vmatpush1.msra.mxu0 0.0
      %396 = vmatprep.subr.mxu0 0.0
      %397 = vmatpush1.msra.mxu0 0.0
      %398 = vmatprep.subr.mxu0 0.0
      %399 = vmatpush1.msra.mxu0 0.0
      %400 = vmatprep.subr.mxu0 0.0
      %401 = vmatpush1.msra.mxu0 0.0
      %402 = vmatprep.subr.mxu0 0.0
      %403 = vmatpush1.msra.mxu0 0.0
      %404 = vmatprep.subr.mxu0 0.0
      %405 = vmatpush1.msra.mxu0 0.0
      %406 = vmatprep.subr.mxu0 0.0
      %407 = vmatpush1.msra.mxu0 0.0
      %408 = vmatprep.subr.mxu0 0.0
      %409 = vmatpush1.msra.mxu0 0.0
      %410 = vmatprep.subr.mxu0 0.0
      %411 = vmatpush1.msra.mxu0 0.0
      %412 = vmatprep.subr.mxu0 0.0
      %413 = vmatpush1.msra.mxu0 0.0
      %414 = vmatprep.subr.mxu0 0.0
      %415 = vmatpush1.msra.mxu0 0.0
      %416 = vmatprep.subr.mxu0 0.0
      %417 = vmatpush1.msra.mxu0 0.0
      %418 = vmatprep.subr.mxu0 0.0
      %419 = vmatpush1.msra.mxu0 0.0
      %420 = vmatprep.subr.mxu0 0.0
      %421 = vmatpush1.msra.mxu0 0.0
      %422 = vmatprep.subr.mxu0 0.0
      %423 = vmatpush1.msra.mxu0 0.0
      %424 = vmatprep.subr.mxu0 0.0
      %425 = vmatpush1.msra.mxu0 0.0
      %426 = vmatprep.subr.mxu0 0.0
      %427 = vmatpush1.msra.mxu0 0.0
      %428 = vmatprep.subr.mxu0 0.0
      %429 = vmatpush1.msra.mxu0 0.0
      %430 = vmatprep.subr.mxu0 0.0
      %431 = vmatpush1.msra.mxu0 0.0
      %432 = vmatprep.subr.mxu0 0.0
      %433 = vmatpush1.msra.mxu0 0.0
      %434 = vmatprep.mubr.f32.mxu0 0.0
      %435 = vmatmul.mubr.f32.gmra.mrb[0].mxu0 %v314
      %v436 = vpop.f32.mrb[0].mxu0
      %v437 = vadd.f32 %v310, %v436
      %v438 = vpop.f32.mrb[0].mxu0
      %439 = vmatprep.mubr.f32.mxu0 0.0
      %440 = vmatmul.mubr.f32.gmra.mrb[0].mxu0 %v317
      %v441 = vpop.f32.mrb[0].mxu0
      %v442 = vadd.f32 %v310, %v441
      %v443 = vpop.f32.mrb[0].mxu0
      %444 = vmatprep.mubr.f32.mxu0 0.0
      %445 = vmatmul.mubr.f32.gmra.mrb[0].mxu0 %v320
      %v446 = vpop.f32.mrb[0].mxu0
      %v447 = vadd.f32 %v310, %v446
      %v448 = vpop.f32.mrb[0].mxu0
      %449 = vmatprep.mubr.f32.mxu0 0.0
      %450 = vmatmul.mubr.f32.gmra.mrb[0].mxu0 %v323
      %v451 = vpop.f32.mrb[0].mxu0
      %v452 = vadd.f32 %v310, %v451
      %v453 = vpop.f32.mrb[0].mxu0
      %454 = vmatprep.mubr.f32.mxu0 0.0
      %455 = vmatmul.mubr.f32.gmra.mrb[0].mxu0 %v326
      %v456 = vpop.f32.mrb[0].mxu0
      %v457 = vadd.f32 %v310, %v456
      %v458 = vpop.f32.mrb[0].mxu0
      %459 = vmatprep.mubr.f32.mxu0 0.0
      %460 = vmatmul.mubr.f32.gmra.mrb[0].mxu0 %v329
      %v461 = vpop.f32.mrb[0].mxu0
      %v462 = vadd.f32 %v310, %v461
      %v463 = vpop.f32.mrb[0].mxu0
      %464 = vmatprep.mubr.f32.mxu0 0.0
      %465 = vmatmul.mubr.f32.gmra.mrb[0].mxu0 %v332
      %v466 = vpop.f32.mrb[0].mxu0
      %v467 = vadd.f32 %v310, %v466
      %v468 = vpop.f32.mrb[0].mxu0
      %469 = vmatprep.mubr.f32.mxu0 0.0
      %470 = vmatmul.mubr.f32.gmra.mrb[0].mxu0 %v335
      %v471 = vpop.f32.mrb[0].mxu0
      %v472 = vadd.f32 %v310, %v471
      %v473 = vpop.f32.mrb[0].mxu0
      %474 = vmatprep.mubr.f32.mxu0 0.0
      %475 = vmatmul.mubr.f32.gmra.mrb[0].mxu0 %v338
      %v476 = vpop.f32.mrb[0].mxu0
      %v477 = vadd.f32 %v310, %v476
      %v478 = vpop.f32.mrb[0].mxu0
      %479 = vmatprep.mubr.f32.mxu0 0.0
      %480 = vmatmul.mubr.f32.gmra.mrb[0].mxu0 %v341
      %v481 = vpop.f32.mrb[0].mxu0
      %v482 = vadd.f32 %v310, %v481
      %v483 = vpop.f32.mrb[0].mxu0
      %484 = vmatprep.mubr.f32.mxu0 0.0
      %485 = vmatmul.mubr.f32.gmra.mrb[0].mxu0 %v344
      %v486 = vpop.f32.mrb[0].mxu0
      %v487 = vadd.f32 %v310, %v486
      %v488 = vpop.f32.mrb[0].mxu0
      %489 = vmatprep.mubr.f32.mxu0 0.0
      %490 = vmatmul.mubr.f32.gmra.mrb[0].mxu0 %v347
      %v491 = vpop.f32.mrb[0].mxu0
      %v492 = vadd.f32 %v310, %v491
      %v493 = vpop.f32.mrb[0].mxu0
      %494 = vmatprep.mubr.f32.mxu0 0.0
      %495 = vmatmul.mubr.f32.gmra.mrb[0].mxu0 %v350
      %v496 = vpop.f32.mrb[0].mxu0
      %v497 = vadd.f32 %v310, %v496
      %v498 = vpop.f32.mrb[0].mxu0
      %499 = vmatprep.mubr.f32.mxu0 0.0
      %500 = vmatmul.mubr.f32.gmra.mrb[0].mxu0 %v353
      %v501 = vpop.f32.mrb[0].mxu0
      %v502 = vadd.f32 %v310, %v501
      %v503 = vpop.f32.mrb[0].mxu0
      %504 = vmatprep.mubr.f32.mxu0 0.0
      %505 = vmatmul.mubr.f32.gmra.mrb[0].mxu0 %v356
      %v506 = vpop.f32.mrb[0].mxu0
      %v507 = vadd.f32 %v310, %v506
      %v508 = vpop.f32.mrb[0].mxu0
      %509 = vmatprep.mubr.f32.mxu0 0.0
      %510 = vmatmul.mubr.f32.gmra.mrb[0].mxu0 %v359
      %v511 = vpop.f32.mrb[0].mxu0
      %v512 = vadd.f32 %v310, %v511
      %v513 = vpop.f32.mrb[0].mxu0
      %514 = vmatprep.mubr.f32.mxu0 0.0
      %515 = vmatmul.mubr.f32.gmra.mrb[0].mxu0 %v362
      %v516 = vpop.f32.mrb[0].mxu0
      %v517 = vadd.f32 %v310, %v516
      %v518 = vpop.f32.mrb[0].mxu0
      %519 = vmatprep.mubr.f32.mxu0 0.0
      %520 = vmatmul.mubr.f32.gmra.mrb[0].mxu0 %v365
      %v521 = vpop.f32.mrb[0].mxu0
      %v522 = vadd.f32 %v310, %v521
      %v523 = vpop.f32.mrb[0].mxu0
      %524 = vmatprep.mubr.f32.mxu0 0.0
      %525 = vmatmul.mubr.f32.gmra.mrb[0].mxu0 %v368
      %v526 = vpop.f32.mrb[0].mxu0
      %v527 = vadd.f32 %v310, %v526
      %v528 = vpop.f32.mrb[0].mxu0
      %529 = vdwg.mxu0
      %v530 = vmax.f32 %v437, 0.0
      %v531 = vmax.f32 %v442, 0.0
      %v532 = vmax.f32 %v447, 0.0
      %v533 = vmax.f32 %v452, 0.0
      %v534 = vmax.f32 %v457, 0.0
      %v535 = vmax.f32 %v462, 0.0
      %v536 = vmax.f32 %v467, 0.0
      %v537 = vmax.f32 %v472, 0.0
      %v538 = vmax.f32 %v477, 0.0
      %v539 = vmax.f32 %v482, 0.0
      %v540 = vmax.f32 %v487, 0.0
      %v541 = vmax.f32 %v492, 0.0
      %v542 = vmax.f32 %v497, 0.0
      %v543 = vmax.f32 %v502, 0.0
      %v544 = vmax.f32 %v507, 0.0
      %v545 = vmax.f32 %v512, 0.0
      %v546 = vmax.f32 %v517, 0.0
      %v547 = vmax.f32 %v522, 0.0
      %v548 = vmax.f32 %v527, 0.0
      %v549 = vld [vmem:[%s3] sm:$0xff]
      %v550 = vld [vmem:[%s3 + $0x8] sm:$0xff]
      %v551 = vld [vmem:[%s3 + $0x10] sm:$0xff]
      %v552 = vld [vmem:[%s3 + $0x18] sm:$0xff]
      %v553 = vld [vmem:[%s3 + $0x20] sm:$0xff]
      %v554 = vld [vmem:[%s3 + $0x28] sm:$0xff]
      %v555 = vld [vmem:[%s3 + $0x30] sm:$0xff]
      %v556 = vld [vmem:[%s3 + $0x38] sm:$0xff]
      %v557 = vld [vmem:[%s3 + $0x40] sm:$0xff]
      %v558 = vld [vmem:[%s3 + $0x48] sm:$0xff]
      %v559 = vld [vmem:[%s3 + $0x50] sm:$0xff]
      %v560 = vld [vmem:[%s3 + $0x58] sm:$0xff]
      %v561 = vld [vmem:[%s3 + $0x60] sm:$0xff]
      %v562 = vld [vmem:[%s3 + $0x68] sm:$0xff]
      %v563 = vld [vmem:[%s3 + $0x70] sm:$0xff]
      %v564 = vld [vmem:[%s3 + $0x78] sm:$0xff]
      %v565 = vld [vmem:[%s4] sm:$0x1]
      %v567 = vlaneseq
      %v568 = vshrl.u32 %v567, 7
      %v569 = vsub.s32 0, %v568
      %v570 = vrot.slane %v565, %v569
      %572 = vmatprep.subr.mxu0 0.0
      %573 = vmatpush1.msra.mxu0 %v549
      %574 = vmatprep.subr.mxu0 0.0
      %575 = vmatpush1.msra.mxu0 %v550
      %576 = vmatprep.subr.mxu0 0.0
      %577 = vmatpush1.msra.mxu0 %v551
      %578 = vmatprep.subr.mxu0 0.0
      %579 = vmatpush1.msra.mxu0 %v552
      %580 = vmatprep.subr.mxu0 0.0
      %581 = vmatpush1.msra.mxu0 %v553
      %582 = vmatprep.subr.mxu0 0.0
      %583 = vmatpush1.msra.mxu0 %v554
      %584 = vmatprep.subr.mxu0 0.0
      %585 = vmatpush1.msra.mxu0 %v555
      %586 = vmatprep.subr.mxu0 0.0
      %587 = vmatpush1.msra.mxu0 %v556
      %588 = vmatprep.subr.mxu0 0.0
      %589 = vmatpush1.msra.mxu0 %v557
      %590 = vmatprep.subr.mxu0 0.0
      %591 = vmatpush1.msra.mxu0 %v558
      %592 = vmatprep.subr.mxu0 0.0
      %593 = vmatpush1.msra.mxu0 %v559
      %594 = vmatprep.subr.mxu0 0.0
      %595 = vmatpush1.msra.mxu0 %v560
      %596 = vmatprep.subr.mxu0 0.0
      %597 = vmatpush1.msra.mxu0 %v561
      %598 = vmatprep.subr.mxu0 0.0
      %599 = vmatpush1.msra.mxu0 %v562
      %600 = vmatprep.subr.mxu0 0.0
      %601 = vmatpush1.msra.mxu0 %v563
      %602 = vmatprep.subr.mxu0 0.0
      %603 = vmatpush1.msra.mxu0 %v564
      %604 = vmatprep.subr.mxu0 0.0
      %605 = vmatpush1.msra.mxu0 0.0
      %606 = vmatprep.subr.mxu0 0.0
      %607 = vmatpush1.msra.mxu0 0.0
      %608 = vmatprep.subr.mxu0 0.0
      %609 = vmatpush1.msra.mxu0 0.0
      %610 = vmatprep.subr.mxu0 0.0
      %611 = vmatpush1.msra.mxu0 0.0
      %612 = vmatprep.subr.mxu0 0.0
      %613 = vmatpush1.msra.mxu0 0.0
      %614 = vmatprep.subr.mxu0 0.0
      %615 = vmatpush1.msra.mxu0 0.0
      %616 = vmatprep.subr.mxu0 0.0
      %617 = vmatpush1.msra.mxu0 0.0
      %618 = vmatprep.subr.mxu0 0.0
      %619 = vmatpush1.msra.mxu0 0.0
      %620 = vmatprep.subr.mxu0 0.0
      %621 = vmatpush1.msra.mxu0 0.0
      %622 = vmatprep.subr.mxu0 0.0
      %623 = vmatpush1.msra.mxu0 0.0
      %624 = vmatprep.subr.mxu0 0.0
      %625 = vmatpush1.msra.mxu0 0.0
      %626 = vmatprep.subr.mxu0 0.0
      %627 = vmatpush1.msra.mxu0 0.0
      %628 = vmatprep.subr.mxu0 0.0
      %629 = vmatpush1.msra.mxu0 0.0
      %630 = vmatprep.subr.mxu0 0.0
      %631 = vmatpush1.msra.mxu0 0.0
      %632 = vmatprep.subr.mxu0 0.0
      %633 = vmatpush1.msra.mxu0 0.0
      %634 = vmatprep.subr.mxu0 0.0
      %635 = vmatpush1.msra.mxu0 0.0
      %636 = vmatprep.mubr.f32.mxu0 0.0
      %637 = vmatmul.mubr.f32.gmra.mrb[0].mxu0 %v530
      %v638 = vpop.f32.mrb[0].mxu0
      %v639 = vadd.f32 %v570, %v638
      %v640 = vpop.f32.mrb[0].mxu0
      %641 = vmatprep.mubr.f32.mxu0 0.0
      %642 = vmatmul.mubr.f32.gmra.mrb[0].mxu0 %v531
      %v643 = vpop.f32.mrb[0].mxu0
      %v644 = vadd.f32 %v570, %v643
      %v645 = vpop.f32.mrb[0].mxu0
      %646 = vmatprep.mubr.f32.mxu0 0.0
      %647 = vmatmul.mubr.f32.gmra.mrb[0].mxu0 %v532
      %v648 = vpop.f32.mrb[0].mxu0
      %v649 = vadd.f32 %v570, %v648
      %v650 = vpop.f32.mrb[0].mxu0
      %651 = vmatprep.mubr.f32.mxu0 0.0
      %652 = vmatmul.mubr.f32.gmra.mrb[0].mxu0 %v533
      %v653 = vpop.f32.mrb[0].mxu0
      %v654 = vadd.f32 %v570, %v653
      %v655 = vpop.f32.mrb[0].mxu0
      %656 = vmatprep.mubr.f32.mxu0 0.0
      %657 = vmatmul.mubr.f32.gmra.mrb[0].mxu0 %v534
      %v658 = vpop.f32.mrb[0].mxu0
      %v659 = vadd.f32 %v570, %v658
      %v660 = vpop.f32.mrb[0].mxu0
      %661 = vmatprep.mubr.f32.mxu0 0.0
      %662 = vmatmul.mubr.f32.gmra.mrb[0].mxu0 %v535
      %v663 = vpop.f32.mrb[0].mxu0
      %v664 = vadd.f32 %v570, %v663
      %v665 = vpop.f32.mrb[0].mxu0
      %666 = vmatprep.mubr.f32.mxu0 0.0
      %667 = vmatmul.mubr.f32.gmra.mrb[0].mxu0 %v536
      %v668 = vpop.f32.mrb[0].mxu0
      %v669 = vadd.f32 %v570, %v668
      %v670 = vpop.f32.mrb[0].mxu0
      %671 = vmatprep.mubr.f32.mxu0 0.0
      %672 = vmatmul.mubr.f32.gmra.mrb[0].mxu0 %v537
      %v673 = vpop.f32.mrb[0].mxu0
      %v674 = vadd.f32 %v570, %v673
      %v675 = vpop.f32.mrb[0].mxu0
      %676 = vmatprep.mubr.f32.mxu0 0.0
      %677 = vmatmul.mubr.f32.gmra.mrb[0].mxu0 %v538
      %v678 = vpop.f32.mrb[0].mxu0
      %v679 = vadd.f32 %v570, %v678
      %v680 = vpop.f32.mrb[0].mxu0
      %681 = vmatprep.mubr.f32.mxu0 0.0
      %682 = vmatmul.mubr.f32.gmra.mrb[0].mxu0 %v539
      %v683 = vpop.f32.mrb[0].mxu0
      %v684 = vadd.f32 %v570, %v683
      %v685 = vpop.f32.mrb[0].mxu0
      %686 = vmatprep.mubr.f32.mxu0 0.0
      %687 = vmatmul.mubr.f32.gmra.mrb[0].mxu0 %v540
      %v688 = vpop.f32.mrb[0].mxu0
      %v689 = vadd.f32 %v570, %v688
      %v690 = vpop.f32.mrb[0].mxu0
      %691 = vmatprep.mubr.f32.mxu0 0.0
      %692 = vmatmul.mubr.f32.gmra.mrb[0].mxu0 %v541
      %v693 = vpop.f32.mrb[0].mxu0
      %v694 = vadd.f32 %v570, %v693
      %v695 = vpop.f32.mrb[0].mxu0
      %696 = vmatprep.mubr.f32.mxu0 0.0
      %697 = vmatmul.mubr.f32.gmra.mrb[0].mxu0 %v542
      %v698 = vpop.f32.mrb[0].mxu0
      %v699 = vadd.f32 %v570, %v698
      %v700 = vpop.f32.mrb[0].mxu0
      %701 = vmatprep.mubr.f32.mxu0 0.0
      %702 = vmatmul.mubr.f32.gmra.mrb[0].mxu0 %v543
      %v703 = vpop.f32.mrb[0].mxu0
      %v704 = vadd.f32 %v570, %v703
      %v705 = vpop.f32.mrb[0].mxu0
      %706 = vmatprep.mubr.f32.mxu0 0.0
      %707 = vmatmul.mubr.f32.gmra.mrb[0].mxu0 %v544
      %v708 = vpop.f32.mrb[0].mxu0
      %v709 = vadd.f32 %v570, %v708
      %v710 = vpop.f32.mrb[0].mxu0
      %711 = vmatprep.mubr.f32.mxu0 0.0
      %712 = vmatmul.mubr.f32.gmra.mrb[0].mxu0 %v545
      %v713 = vpop.f32.mrb[0].mxu0
      %v714 = vadd.f32 %v570, %v713
      %v715 = vpop.f32.mrb[0].mxu0
      %716 = vmatprep.mubr.f32.mxu0 0.0
      %717 = vmatmul.mubr.f32.gmra.mrb[0].mxu0 %v546
      %v718 = vpop.f32.mrb[0].mxu0
      %v719 = vadd.f32 %v570, %v718
      %v720 = vpop.f32.mrb[0].mxu0
      %721 = vmatprep.mubr.f32.mxu0 0.0
      %722 = vmatmul.mubr.f32.gmra.mrb[0].mxu0 %v547
      %v723 = vpop.f32.mrb[0].mxu0
      %v724 = vadd.f32 %v570, %v723
      %v725 = vpop.f32.mrb[0].mxu0
      %726 = vmatprep.mubr.f32.mxu0 0.0
      %727 = vmatmul.mubr.f32.gmra.mrb[0].mxu0 %v548
      %v728 = vpop.f32.mrb[0].mxu0
      %v729 = vadd.f32 %v570, %v728
      %v730 = vpop.f32.mrb[0].mxu0
      %731 = vdwg.mxu0
      %v732 = vmax.f32 %v639, 0.0
      %v733 = vmax.f32 %v644, 0.0
      %v734 = vmax.f32 %v649, 0.0
      %v735 = vmax.f32 %v654, 0.0
      %v736 = vmax.f32 %v659, 0.0
      %v737 = vmax.f32 %v664, 0.0
      %v738 = vmax.f32 %v669, 0.0
      %v739 = vmax.f32 %v674, 0.0
      %v740 = vmax.f32 %v679, 0.0
      %v741 = vmax.f32 %v684, 0.0
      %v742 = vmax.f32 %v689, 0.0
      %v743 = vmax.f32 %v694, 0.0
      %v744 = vmax.f32 %v699, 0.0
      %v745 = vmax.f32 %v704, 0.0
      %v746 = vmax.f32 %v709, 0.0
      %v747 = vmax.f32 %v714, 0.0
      %v748 = vmax.f32 %v719, 0.0
      %v749 = vmax.f32 %v724, 0.0
      %v750 = vmax.f32 %v729, 0.0
      %v751 = vld [vmem:[%s5] sm:$0xff]
      %v752 = vld [vmem:[%s5 + $0x8] sm:$0xff]
      %v753 = vld [vmem:[%s5 + $0x10] sm:$0xff]
      %v754 = vld [vmem:[%s5 + $0x18] sm:$0xff]
      %v755 = vld [vmem:[%s5 + $0x20] sm:$0xff]
      %v756 = vld [vmem:[%s5 + $0x28] sm:$0xff]
      %v757 = vld [vmem:[%s5 + $0x30] sm:$0xff]
      %v758 = vld [vmem:[%s5 + $0x38] sm:$0xff]
      %v759 = vld [vmem:[%s5 + $0x40] sm:$0xff]
      %v760 = vld [vmem:[%s5 + $0x48] sm:$0xff]
      %v761 = vld [vmem:[%s5 + $0x50] sm:$0xff]
      %v762 = vld [vmem:[%s5 + $0x58] sm:$0xff]
      %v763 = vld [vmem:[%s5 + $0x60] sm:$0xff]
      %v764 = vld [vmem:[%s5 + $0x68] sm:$0xff]
      %v765 = vld [vmem:[%s5 + $0x70] sm:$0xff]
      %v766 = vld [vmem:[%s5 + $0x78] sm:$0xff]
      %v767 = vld [vmem:[%s6] sm:$0x1]
      %v769 = vlaneseq
      %v770 = vshrl.u32 %v769, 7
      %v771 = vsub.s32 0, %v770
      %v772 = vrot.slane %v767, %v771
      %774 = vmatprep.subr.mxu0 0.0
      %775 = vmatpush1.msra.mxu0 %v751
      %776 = vmatprep.subr.mxu0 0.0
      %777 = vmatpush1.msra.mxu0 %v752
      %778 = vmatprep.subr.mxu0 0.0
      %779 = vmatpush1.msra.mxu0 %v753
      %780 = vmatprep.subr.mxu0 0.0
      %781 = vmatpush1.msra.mxu0 %v754
      %782 = vmatprep.subr.mxu0 0.0
      %783 = vmatpush1.msra.mxu0 %v755
      %784 = vmatprep.subr.mxu0 0.0
      %785 = vmatpush1.msra.mxu0 %v756
      %786 = vmatprep.subr.mxu0 0.0
      %787 = vmatpush1.msra.mxu0 %v757
      %788 = vmatprep.subr.mxu0 0.0
      %789 = vmatpush1.msra.mxu0 %v758
      %790 = vmatprep.subr.mxu0 0.0
      %791 = vmatpush1.msra.mxu0 %v759
      %792 = vmatprep.subr.mxu0 0.0
      %793 = vmatpush1.msra.mxu0 %v760
      %794 = vmatprep.subr.mxu0 0.0
      %795 = vmatpush1.msra.mxu0 %v761
      %796 = vmatprep.subr.mxu0 0.0
      %797 = vmatpush1.msra.mxu0 %v762
      %798 = vmatprep.subr.mxu0 0.0
      %799 = vmatpush1.msra.mxu0 %v763
      %800 = vmatprep.subr.mxu0 0.0
      %801 = vmatpush1.msra.mxu0 %v764
      %802 = vmatprep.subr.mxu0 0.0
      %803 = vmatpush1.msra.mxu0 %v765
      %804 = vmatprep.subr.mxu0 0.0
      %805 = vmatpush1.msra.mxu0 %v766
      %806 = vmatprep.subr.mxu0 0.0
      %807 = vmatpush1.msra.mxu0 0.0
      %808 = vmatprep.subr.mxu0 0.0
      %809 = vmatpush1.msra.mxu0 0.0
      %810 = vmatprep.subr.mxu0 0.0
      %811 = vmatpush1.msra.mxu0 0.0
      %812 = vmatprep.subr.mxu0 0.0
      %813 = vmatpush1.msra.mxu0 0.0
      %814 = vmatprep.subr.mxu0 0.0
      %815 = vmatpush1.msra.mxu0 0.0
      %816 = vmatprep.subr.mxu0 0.0
      %817 = vmatpush1.msra.mxu0 0.0
      %818 = vmatprep.subr.mxu0 0.0
      %819 = vmatpush1.msra.mxu0 0.0
      %820 = vmatprep.subr.mxu0 0.0
      %821 = vmatpush1.msra.mxu0 0.0
      %822 = vmatprep.subr.mxu0 0.0
      %823 = vmatpush1.msra.mxu0 0.0
      %824 = vmatprep.subr.mxu0 0.0
      %825 = vmatpush1.msra.mxu0 0.0
      %826 = vmatprep.subr.mxu0 0.0
      %827 = vmatpush1.msra.mxu0 0.0
      %828 = vmatprep.subr.mxu0 0.0
      %829 = vmatpush1.msra.mxu0 0.0
      %830 = vmatprep.subr.mxu0 0.0
      %831 = vmatpush1.msra.mxu0 0.0
      %832 = vmatprep.subr.mxu0 0.0
      %833 = vmatpush1.msra.mxu0 0.0
      %834 = vmatprep.subr.mxu0 0.0
      %835 = vmatpush1.msra.mxu0 0.0
      %836 = vmatprep.subr.mxu0 0.0
      %837 = vmatpush1.msra.mxu0 0.0
      %838 = vmatprep.mubr.f32.mxu0 0.0
      %839 = vmatmul.mubr.f32.gmra.mrb[0].mxu0 %v732
      %v840 = vpop.f32.mrb[0].mxu0
      %v841 = vadd.f32 %v772, %v840
      %v842 = vpop.f32.mrb[0].mxu0
      %843 = vmatprep.mubr.f32.mxu0 0.0
      %844 = vmatmul.mubr.f32.gmra.mrb[0].mxu0 %v733
      %v845 = vpop.f32.mrb[0].mxu0
      %v846 = vadd.f32 %v772, %v845
      %v847 = vpop.f32.mrb[0].mxu0
      %848 = vmatprep.mubr.f32.mxu0 0.0
      %849 = vmatmul.mubr.f32.gmra.mrb[0].mxu0 %v734
      %v850 = vpop.f32.mrb[0].mxu0
      %v851 = vadd.f32 %v772, %v850
      %v852 = vpop.f32.mrb[0].mxu0
      %853 = vmatprep.mubr.f32.mxu0 0.0
      %854 = vmatmul.mubr.f32.gmra.mrb[0].mxu0 %v735
      %v855 = vpop.f32.mrb[0].mxu0
      %v856 = vadd.f32 %v772, %v855
      %v857 = vpop.f32.mrb[0].mxu0
      %858 = vmatprep.mubr.f32.mxu0 0.0
      %859 = vmatmul.mubr.f32.gmra.mrb[0].mxu0 %v736
      %v860 = vpop.f32.mrb[0].mxu0
      %v861 = vadd.f32 %v772, %v860
      %v862 = vpop.f32.mrb[0].mxu0
      %863 = vmatprep.mubr.f32.mxu0 0.0
      %864 = vmatmul.mubr.f32.gmra.mrb[0].mxu0 %v737
      %v865 = vpop.f32.mrb[0].mxu0
      %v866 = vadd.f32 %v772, %v865
      %v867 = vpop.f32.mrb[0].mxu0
      %868 = vmatprep.mubr.f32.mxu0 0.0
      %869 = vmatmul.mubr.f32.gmra.mrb[0].mxu0 %v738
      %v870 = vpop.f32.mrb[0].mxu0
      %v871 = vadd.f32 %v772, %v870
      %v872 = vpop.f32.mrb[0].mxu0
      %873 = vmatprep.mubr.f32.mxu0 0.0
      %874 = vmatmul.mubr.f32.gmra.mrb[0].mxu0 %v739
      %v875 = vpop.f32.mrb[0].mxu0
      %v876 = vadd.f32 %v772, %v875
      %v877 = vpop.f32.mrb[0].mxu0
      %878 = vmatprep.mubr.f32.mxu0 0.0
      %879 = vmatmul.mubr.f32.gmra.mrb[0].mxu0 %v740
      %v880 = vpop.f32.mrb[0].mxu0
      %v881 = vadd.f32 %v772, %v880
      %v882 = vpop.f32.mrb[0].mxu0
      %883 = vmatprep.mubr.f32.mxu0 0.0
      %884 = vmatmul.mubr.f32.gmra.mrb[0].mxu0 %v741
      %v885 = vpop.f32.mrb[0].mxu0
      %v886 = vadd.f32 %v772, %v885
      %v887 = vpop.f32.mrb[0].mxu0
      %888 = vmatprep.mubr.f32.mxu0 0.0
      %889 = vmatmul.mubr.f32.gmra.mrb[0].mxu0 %v742
      %v890 = vpop.f32.mrb[0].mxu0
      %v891 = vadd.f32 %v772, %v890
      %v892 = vpop.f32.mrb[0].mxu0
      %893 = vmatprep.mubr.f32.mxu0 0.0
      %894 = vmatmul.mubr.f32.gmra.mrb[0].mxu0 %v743
      %v895 = vpop.f32.mrb[0].mxu0
      %v896 = vadd.f32 %v772, %v895
      %v897 = vpop.f32.mrb[0].mxu0
      %898 = vmatprep.mubr.f32.mxu0 0.0
      %899 = vmatmul.mubr.f32.gmra.mrb[0].mxu0 %v744
      %v900 = vpop.f32.mrb[0].mxu0
      %v901 = vadd.f32 %v772, %v900
      %v902 = vpop.f32.mrb[0].mxu0
      %903 = vmatprep.mubr.f32.mxu0 0.0
      %904 = vmatmul.mubr.f32.gmra.mrb[0].mxu0 %v745
      %v905 = vpop.f32.mrb[0].mxu0
      %v906 = vadd.f32 %v772, %v905
      %v907 = vpop.f32.mrb[0].mxu0
      %908 = vmatprep.mubr.f32.mxu0 0.0
      %909 = vmatmul.mubr.f32.gmra.mrb[0].mxu0 %v746
      %v910 = vpop.f32.mrb[0].mxu0
      %v911 = vadd.f32 %v772, %v910
      %v912 = vpop.f32.mrb[0].mxu0
      %913 = vmatprep.mubr.f32.mxu0 0.0
      %914 = vmatmul.mubr.f32.gmra.mrb[0].mxu0 %v747
      %v915 = vpop.f32.mrb[0].mxu0
      %v916 = vadd.f32 %v772, %v915
      %v917 = vpop.f32.mrb[0].mxu0
      %918 = vmatprep.mubr.f32.mxu0 0.0
      %919 = vmatmul.mubr.f32.gmra.mrb[0].mxu0 %v748
      %v920 = vpop.f32.mrb[0].mxu0
      %v921 = vadd.f32 %v772, %v920
      %v922 = vpop.f32.mrb[0].mxu0
      %923 = vmatprep.mubr.f32.mxu0 0.0
      %924 = vmatmul.mubr.f32.gmra.mrb[0].mxu0 %v749
      %v925 = vpop.f32.mrb[0].mxu0
      %v926 = vadd.f32 %v772, %v925
      %v927 = vpop.f32.mrb[0].mxu0
      %928 = vmatprep.mubr.f32.mxu0 0.0
      %929 = vmatmul.mubr.f32.gmra.mrb[0].mxu0 %v750
      %v930 = vpop.f32.mrb[0].mxu0
      %v931 = vadd.f32 %v772, %v930
      %v932 = vpop.f32.mrb[0].mxu0
      %933 = vdwg.mxu0
      %v934 = vxor.u32 %v841, 2147483648
      %v935 = vxor.u32 %v846, 2147483648
      %v936 = vxor.u32 %v851, 2147483648
      %v937 = vxor.u32 %v856, 2147483648
      %v938 = vxor.u32 %v861, 2147483648
      %v939 = vxor.u32 %v866, 2147483648
      %v940 = vxor.u32 %v871, 2147483648
      %v941 = vxor.u32 %v876, 2147483648
      %v942 = vxor.u32 %v881, 2147483648
      %v943 = vxor.u32 %v886, 2147483648
      %v944 = vxor.u32 %v891, 2147483648
      %v945 = vxor.u32 %v896, 2147483648
      %v946 = vxor.u32 %v901, 2147483648
      %v947 = vxor.u32 %v906, 2147483648
      %v948 = vxor.u32 %v911, 2147483648
      %v949 = vxor.u32 %v916, 2147483648
      %v950 = vxor.u32 %v921, 2147483648
      %v951 = vxor.u32 %v926, 2147483648
      %v952 = vxor.u32 %v931, 2147483648
      %v953 = vmul.f32 %v934, 1.442695
      %v954 = vpow.pop %v953
      %v955 = vmul.f32 %v935, 1.442695
      %v956 = vpow.pop %v955
      %v957 = vmul.f32 %v936, 1.442695
      %v958 = vpow.pop %v957
      %v959 = vmul.f32 %v937, 1.442695
      %v960 = vpow.pop %v959
      %v961 = vmul.f32 %v938, 1.442695
      %v962 = vpow.pop %v961
      %v963 = vmul.f32 %v939, 1.442695
      %v964 = vpow.pop %v963
      %v965 = vmul.f32 %v940, 1.442695
      %v966 = vpow.pop %v965
      %v967 = vmul.f32 %v941, 1.442695
      %v968 = vpow.pop %v967
      %v969 = vmul.f32 %v942, 1.442695
      %v970 = vpow.pop %v969
      %v971 = vmul.f32 %v943, 1.442695
      %v972 = vpow.pop %v971
      %v973 = vmul.f32 %v944, 1.442695
      %v974 = vpow.pop %v973
      %v975 = vmul.f32 %v945, 1.442695
      %v976 = vpow.pop %v975
      %v977 = vmul.f32 %v946, 1.442695
      %v978 = vpow.pop %v977
      %v979 = vmul.f32 %v947, 1.442695
      %v980 = vpow.pop %v979
      %v981 = vmul.f32 %v948, 1.442695
      %v982 = vpow.pop %v981
      %v983 = vmul.f32 %v949, 1.442695
      %v984 = vpow.pop %v983
      %v985 = vmul.f32 %v950, 1.442695
      %v986 = vpow.pop %v985
      %v987 = vmul.f32 %v951, 1.442695
      %v988 = vpow.pop %v987
      %v989 = vmul.f32 %v952, 1.442695
      %v990 = vpow.pop %v989
      %v991 = vadd.f32 %v954, 1.0
      %v992 = vadd.f32 %v956, 1.0
      %v993 = vadd.f32 %v958, 1.0
      %v994 = vadd.f32 %v960, 1.0
      %v995 = vadd.f32 %v962, 1.0
      %v996 = vadd.f32 %v964, 1.0
      %v997 = vadd.f32 %v966, 1.0
      %v998 = vadd.f32 %v968, 1.0
      %v999 = vadd.f32 %v970, 1.0
      %v1000 = vadd.f32 %v972, 1.0
      %v1001 = vadd.f32 %v974, 1.0
      %v1002 = vadd.f32 %v976, 1.0
      %v1003 = vadd.f32 %v978, 1.0
      %v1004 = vadd.f32 %v980, 1.0
      %v1005 = vadd.f32 %v982, 1.0
      %v1006 = vadd.f32 %v984, 1.0
      %v1007 = vadd.f32 %v986, 1.0
      %v1008 = vadd.f32 %v988, 1.0
      %v1009 = vadd.f32 %v990, 1.0
      %v1010 = vrcp.pop %v991
      %v1011 = vmul.f32 1.0, %v1010
      %v1012 = vrcp.pop %v992
      %v1013 = vmul.f32 1.0, %v1012
      %v1014 = vrcp.pop %v993
      %v1015 = vmul.f32 1.0, %v1014
      %v1016 = vrcp.pop %v994
      %v1017 = vmul.f32 1.0, %v1016
      %v1018 = vrcp.pop %v995
      %v1019 = vmul.f32 1.0, %v1018
      %v1020 = vrcp.pop %v996
      %v1021 = vmul.f32 1.0, %v1020
      %v1022 = vrcp.pop %v997
      %v1023 = vmul.f32 1.0, %v1022
      %v1024 = vrcp.pop %v998
      %v1025 = vmul.f32 1.0, %v1024
      %v1026 = vrcp.pop %v999
      %v1027 = vmul.f32 1.0, %v1026
      %v1028 = vrcp.pop %v1000
      %v1029 = vmul.f32 1.0, %v1028
      %v1030 = vrcp.pop %v1001
      %v1031 = vmul.f32 1.0, %v1030
      %v1032 = vrcp.pop %v1002
      %v1033 = vmul.f32 1.0, %v1032
      %v1034 = vrcp.pop %v1003
      %v1035 = vmul.f32 1.0, %v1034
      %v1036 = vrcp.pop %v1004
      %v1037 = vmul.f32 1.0, %v1036
      %v1038 = vrcp.pop %v1005
      %v1039 = vmul.f32 1.0, %v1038
      %v1040 = vrcp.pop %v1006
      %v1041 = vmul.f32 1.0, %v1040
      %v1042 = vrcp.pop %v1007
      %v1043 = vmul.f32 1.0, %v1042
      %v1044 = vrcp.pop %v1008
      %v1045 = vmul.f32 1.0, %v1044
      %v1046 = vrcp.pop %v1009
      %v1047 = vmul.f32 1.0, %v1046
      %1048 = vst [vmem:[%s280] sm:$0xff] %v1011
      %1049 = vst [vmem:[%s280 + $0x8] sm:$0xff] %v1013
      %1050 = vst [vmem:[%s280 + $0x10] sm:$0xff] %v1015
      %1051 = vst [vmem:[%s280 + $0x18] sm:$0xff] %v1017
      %1052 = vst [vmem:[%s280 + $0x20] sm:$0xff] %v1019
      %1053 = vst [vmem:[%s280 + $0x28] sm:$0xff] %v1021
      %1054 = vst [vmem:[%s280 + $0x30] sm:$0xff] %v1023
      %1055 = vst [vmem:[%s280 + $0x38] sm:$0xff] %v1025
      %1056 = vst [vmem:[%s280 + $0x40] sm:$0xff] %v1027
      %1057 = vst [vmem:[%s280 + $0x48] sm:$0xff] %v1029
      %1058 = vst [vmem:[%s280 + $0x50] sm:$0xff] %v1031
      %1059 = vst [vmem:[%s280 + $0x58] sm:$0xff] %v1033
      %1060 = vst [vmem:[%s280 + $0x60] sm:$0xff] %v1035
      %1061 = vst [vmem:[%s280 + $0x68] sm:$0xff] %v1037
      %1062 = vst [vmem:[%s280 + $0x70] sm:$0xff] %v1039
      %1063 = vst [vmem:[%s280 + $0x78] sm:$0xff] %v1041
      %1064 = vst [vmem:[%s280 + $0x80] sm:$0xff] %v1043
      %1065 = vst [vmem:[%s280 + $0x88] sm:$0xff] %v1045
      %1066 = vst [vmem:[%s280 + $0x90] sm:$0xff] %v1047
      %s1067 = smul.u32 19, %s18
      %p1068 = scmp.lt.s32.totalorder %s1067, 37
      %s1069 = scalar_select %p1068, %s1067, 37
      %s1070 = smul.addr %s1069, 8
      %s1071 = scalar_lea.vmem %s7, %s1070
      // Predicated region
      $region49: #{model2_forward.1} parent=47 // pred_check
        %p1072 = pneg %p188
      $region50: #{model2_forward.1} parent=47 // pred_check_branch
        %1074 = sbr.rel (%p1072) target = $region52
      $region51: #{model2_forward.1} parent=47 // pred_region
        %s1075 = smul.u32 19, %s18
      $region52: #{model2_forward.1} parent=47 // pred_fallthru
        _
    $region48: #{model2_forward.1} parent=5 // pred_fallthru
      _
    %p1076 = scmp.le.s32.totalorder 2, %s13
    // Predicated region
    $region53: #{model2_forward.1} parent=5 // pred_check
      %p1077 = pneg %p1076
    $region54: #{model2_forward.1} parent=5 // pred_check_branch
      %1079 = sbr.rel (%p1077) target = $region56
    $region55: #{model2_forward.1} parent=5 // pred_region
      %s1080 = ssub.s32 %s13, 2
      // Predicated region
      $region57: #{model2_forward.1} parent=55 // pred_check
        %p1081 = pneg %p194
      $region58: #{model2_forward.1} parent=55 // pred_check_branch
        %1083 = sbr.rel (%p1081) target = $region60
      $region59: #{model2_forward.1} parent=55 // pred_region
        %s1084 = smul.u32 19, %s19
        %p1085 = scmp.lt.s32.totalorder %s1084, 37
        %s1086 = scalar_select %p1085, %s1084, 37
        %s1087 = smul.addr %s1086, 8
        %s1088 = scalar_lea.vmem %s7, %s1087
      $region60: #{model2_forward.1} parent=55 // pred_fallthru
        _
    $region56: #{model2_forward.1} parent=5 // pred_fallthru
      _
  $region6: #{model2_forward.1} parent=0 // loop_footer
    %s17 = sadd.s32 1, %s13
  $region7: #{model2_forward.1} parent=0 // loop_footer_branch
    %12 = sbr.rel target = $region3
  $region8: #{model2_forward.1} parent=0 // loop_exit
    _

</llo_original>
